<compile_context>
chip_gen: v7x
topology: tpu7x:2x2x1
jax: 0.10.0
libtpu: 0.0.40
codegen_flags: <defaults>
</compile_context>

<pallas_src>
import jax
import jax.numpy as jnp
from jax.experimental import pallas as pl
from jax.experimental.pallas import tpu as pltpu

_LANE = 128                   # full vreg lane width -> unmasked vst stores
_SUBLANE = 32                 # row-tile alignment valid for f32/bf16/int8/fp8 packing
_MIN_SPLIT_BYTES = 1 << 20    # only split the grid if each piece is >= 1 MiB


def _round_up(v, m):
    return ((v + m - 1) // m) * m


def _select_tuning():
    """Per-generation (target block bytes, vmem_limit_bytes); conservative fallback."""
    block_bytes = 4 << 20      # ~4 MiB output block: safe inside v7x's 64 MiB VMEM
    vmem_limit = 32 << 20
    try:
        info = pltpu.get_tpu_info()
        vmem = getattr(info, "vmem_capacity_bytes", None)
        if vmem is not None and vmem >= (100 << 20):
            # v5e / v6e: 128 MiB physical VMEM -> bigger blocks amortize per-step cost.
            block_bytes = 8 << 20
            vmem_limit = 64 << 20
    except Exception:
        pass
    return block_bytes, vmem_limit


def _add_kernel(x_ref, s_ref, o_ref):
    # Cast in-kernel: rides the (idle) VPU slots of this HBM-bound add and avoids
    # a separate wrapper-side astype that would cost a full extra HBM read+write.
    o_ref[...] = x_ref[...].astype(o_ref.dtype) + s_ref[...].astype(o_ref.dtype)


def shortcut_add(x, skip):
    """Elementwise x + skip (residual shortcut) as a lane-dense tiled Pallas kernel."""
    assert x.shape == skip.shape, "shortcut operands must have identical shapes"
    out_dtype = jnp.result_type(x.dtype, skip.dtype)
    orig_shape = x.shape
    total = x.size

    # Flatten to a lane-dense view (free reshape; no transpose / copy).
    xf = x.reshape(-1)
    sf = skip.reshape(-1)

    # Only pad the (rare) non-multiple-of-128 tail; the row axis stays ragged —
    # Pallas masks the edge block automatically, so no row padding is needed.
    rem = total % _LANE
    if rem:
        xf = jnp.pad(xf, (0, _LANE - rem))
        sf = jnp.pad(sf, (0, _LANE - rem))
    rows = xf.size // _LANE

    x2 = xf.reshape(rows, _LANE)
    s2 = sf.reshape(rows, _LANE)

    block_bytes, vmem_limit = _select_tuning()
    out_itemsize = jnp.dtype(out_dtype).itemsize
    cap_rows = max(_SUBLANE,
                   (block_bytes // (_LANE * out_itemsize)) // _SUBLANE * _SUBLANE)

    if rows <= cap_rows:
        # Single block unless the tensor is big enough that a 2-way split keeps
        # both v7x TensorCores busy (>= 1 MiB per half); at that size the extra
        # ~0.35 us grid step is negligible on single-TC v5e/v6e too.
        n_steps = 2 if rows * _LANE * out_itemsize >= 2 * _MIN_SPLIT_BYTES else 1
    else:
        # Even grid length -> balanced megacore sharding on v7x.
        n_steps = _round_up(pl.cdiv(rows, cap_rows), 2)

    tr = _round_up(pl.cdiv(rows, n_steps), _SUBLANE)
    if tr >= rows:
        tr = rows  # block == full array dims: always layout-legal, single step
    grid = (pl.cdiv(rows, tr),)

    out2 = pl.pallas_call(
        _add_kernel,
        out_shape=jax.ShapeDtypeStruct((rows, _LANE), out_dtype),
        grid_spec=pltpu.PrefetchScalarGridSpec(
            num_scalar_prefetch=0,
            grid=grid,
            in_specs=[
                pl.BlockSpec((tr, _LANE), lambda i: (i, 0)),
                pl.BlockSpec((tr, _LANE), lambda i: (i, 0)),
            ],
            out_specs=pl.BlockSpec((tr, _LANE), lambda i: (i, 0)),
        ),
        compiler_params=pltpu.CompilerParams(
            dimension_semantics=("parallel",),
            vmem_limit_bytes=vmem_limit,
        ),
        # NOTE: input_output_aliases={0: 0} would reuse x's HBM buffer, but in
        # eager (non-donated) execution XLA inserts a defensive copy — an extra
        # HBM pass — so it is deliberately not used here.
    )(x2, s2)

    out = out2.reshape(-1)
    if rem:
        out = out[:total]
    return out.reshape(orig_shape)


class ShortcutLayer:
    """JAX/Pallas port of the PyTorch ShortcutLayer module."""

    def __init__(self, index, source, cache):
        self.index = index
        self.source = source
        self.cache = cache  # host-side list of previously produced feature maps

    def __call__(self, x):
        # Python-level list indexing, exactly as in the PyTorch forward.
        return shortcut_add(x, self.cache[self.index + self.source])

    forward = __call__


if __name__ == "__main__":
    key = jax.random.PRNGKey(0)
    k_x, k_c0, k_c1, k_c2 = jax.random.split(key, 4)

    # Small deterministic shapes consistent with the module's forward:
    # x and the cached feature map share the same (N, C, H, W) shape.
    N, C, H, W = 2, 4, 16, 16
    x = jax.random.normal(k_x, (N, C, H, W), dtype=jnp.float32)
    cache = [
        jax.random.normal(k_c0, (N, C, H, W), dtype=jnp.float32),
        jax.random.normal(k_c1, (N, C, H, W), dtype=jnp.float32),
        jax.random.normal(k_c2, (N, C, H, W), dtype=jnp.float32),
    ]

    # index + source picks the skip-connection tensor out of the cache
    # (typical darknet config: a negative relative `source` offset).
    layer = ShortcutLayer(index=3, source=-3, cache=cache)

    out = jax.block_until_ready(layer(x))
    ref = jax.block_until_ready(x + cache[layer.index + layer.source])

    assert out.shape == x.shape and out.dtype == x.dtype
    assert jnp.allclose(out, ref, atol=1e-6, rtol=1e-6), "mismatch vs reference"
    print("KERNEL_OK")
</pallas_src>

<mosaic_0001>
module attributes {stable_mosaic.version = 11 : i64} {
  func.func @_add_kernel(%arg0: i32, %arg1: memref<16x128xf32, #tpu.memory_space<vmem>>, %arg2: memref<16x128xf32, #tpu.memory_space<vmem>>, %arg3: memref<16x128xf32, #tpu.memory_space<vmem>>) attributes {dimension_semantics = [#tpu.dimension_semantics<parallel>], iteration_bounds = array<i64: 1>, scalar_prefetch = 0 : i64, scratch_operands = 0 : i64, tpu.core_type = #tpu.core_type<tc>, window_params = [{transform_indices = @transform_0, window_bounds = array<i64: 16, 128>}, {transform_indices = @transform_1, window_bounds = array<i64: 16, 128>}, {transform_indices = @transform_2, window_bounds = array<i64: 16, 128>}]} {
    %c0 = arith.constant 0 : index
    %c0_0 = arith.constant 0 : index
    %0 = vector.load %arg1[%c0, %c0_0] : memref<16x128xf32, #tpu.memory_space<vmem>>, vector<16x128xf32>
    %c0_1 = arith.constant 0 : index
    %c0_2 = arith.constant 0 : index
    %1 = vector.load %arg2[%c0_1, %c0_2] : memref<16x128xf32, #tpu.memory_space<vmem>>, vector<16x128xf32>
    %2 = arith.addf %0, %1 : vector<16x128xf32>
    %c0_3 = arith.constant 0 : index
    %c0_4 = arith.constant 0 : index
    %3 = vector.load %arg3[%c0_3, %c0_4] : memref<16x128xf32, #tpu.memory_space<vmem>>, vector<16x128xf32>
    tpu.vector_store %arg3[%c0_3, %c0_4], %2 {strides = array<i32>} : memref<16x128xf32, #tpu.memory_space<vmem>>, vector<16x128xf32>,
    return
  }
  func.func @transform_0(%arg0: i32) -> (i32, i32) {
    %c0_i32 = arith.constant 0 : i32
    %c0_i32_0 = arith.constant 0 : i32
    return %arg0, %c0_i32 : i32, i32
  }
  func.func @transform_1(%arg0: i32) -> (i32, i32) {
    %c0_i32 = arith.constant 0 : i32
    %c0_i32_0 = arith.constant 0 : i32
    return %arg0, %c0_i32 : i32, i32
  }
  func.func @transform_2(%arg0: i32) -> (i32, i32) {
    %c0_i32 = arith.constant 0 : i32
    %c0_i32_0 = arith.constant 0 : i32
    return %arg0, %c0_i32 : i32, i32
  }
}

</mosaic_0001>

<llo_original>
// kernel: tpu_custom_call.1
$region0: #{tpu_custom_call.1}
  #allocation0 [shape = 'u32[]', space=smem, size = 0x4, offset = 0x4, fixed_abs, tag = 'smem constant byte address 0x4 - core index']
  #allocation1 [shape = 'u32[144,128]{1,0:T(1,128)}', space=vmem, size = 0x12000, scoped, tag = 'internal scratch']
  %s0 = inlined_call_operand.hbm [shape: f32[16,128], index: 0, kind: input, shape index: {}]
  %s1 = inlined_call_operand.hbm [shape: f32[16,128], index: 1, kind: input, shape index: {}]
  %s2 = inlined_call_operand.hbm [shape: f32[16,128], index: 2, kind: output, shape index: {}]
  %s3 = sld [smem:[#allocation0]]
  $region26: #{tpu_custom_call.1} parent=0
    _
  %s5 = ssub.s32 1, %s3
  %s6 = scalar_select 0, %s5, %s3
  $region1: #{tpu_custom_call.1} parent=0
    #allocation2 [shape = 'u8[8192]{0}', space=vmem, size = 0x2000, scoped, tag = 'input window, operand 0, single buffered']
    #allocation3 [shape = 's32[1]{0}', space=sflag, size = 0x4, scoped, tag = 'scoped memory for tpu_custom_call.1']
    #allocation4 [shape = 's32[1]{0}', space=sflag, size = 0x4, scoped, tag = 'scoped memory for tpu_custom_call.1']
    #allocation5 [shape = 'u8[8192]{0}', space=vmem, size = 0x2000, scoped, tag = 'input window, operand 1, single buffered']
    #allocation6 [shape = 's32[1]{0}', space=sflag, size = 0x4, scoped, tag = 'scoped memory for tpu_custom_call.1']
    #allocation7 [shape = 'u8[8192]{0}', space=vmem, size = 0x2000, scoped, tag = 'output window, operand 0, single buffered']
    %7 = vsyncpa [#allocation3], 0
    %8 = vsyncpa [#allocation6], 0
    %9 = vsyncpa [#allocation4], 0
    // Predicated region
    $region2: #{tpu_custom_call.1} parent=1 // pred_check
      _
    $region3: #{tpu_custom_call.1} parent=1 // pred_check_branch
      %11 = sbr.rel (0) target = $region5
    $region4: #{tpu_custom_call.1} parent=1 // pred_region
      %s13 = ssub.s32 256, 256
      %14 = vsyncadd [#allocation3], %s13
      %s15 = sshll.u32 [#allocation2], 4
      %s16 = int_to_ptr.vmem [resolvable:$true] %s15
      %21 = dma.hbm_to_vmem [thread:$0]  %s0, 256, %s16, [#allocation3], 128, 128, 8
    $region5: #{tpu_custom_call.1} parent=1 // pred_fallthru
      _
    // Predicated region
    $region6: #{tpu_custom_call.1} parent=1 // pred_check
      _
    $region7: #{tpu_custom_call.1} parent=1 // pred_check_branch
      %23 = sbr.rel (0) target = $region9
    $region8: #{tpu_custom_call.1} parent=1 // pred_region
      %s25 = ssub.s32 256, 256
      %26 = vsyncadd [#allocation6], %s25
      %s27 = sshll.u32 [#allocation5], 4
      %s28 = int_to_ptr.vmem [resolvable:$true] %s27
      %33 = dma.hbm_to_vmem [thread:$0]  %s1, 256, %s28, [#allocation6], 128, 128, 8
    $region9: #{tpu_custom_call.1} parent=1 // pred_fallthru
      _
    // Predicated region
    $region10: #{tpu_custom_call.1} parent=1 // pred_check
      _
    $region11: #{tpu_custom_call.1} parent=1 // pred_check_branch
      %35 = sbr.rel (0) target = $region13
    $region12: #{tpu_custom_call.1} parent=1 // pred_region
      %36 = dma.done [#allocation3], 256
    $region13: #{tpu_custom_call.1} parent=1 // pred_fallthru
      _
    // Predicated region
    $region14: #{tpu_custom_call.1} parent=1 // pred_check
      _
    $region15: #{tpu_custom_call.1} parent=1 // pred_check_branch
      %38 = sbr.rel (0) target = $region17
    $region16: #{tpu_custom_call.1} parent=1 // pred_region
      %39 = dma.done [#allocation6], 256
    $region17: #{tpu_custom_call.1} parent=1 // pred_fallthru
      _
    %v40 = vld [vmem:[#allocation2] sm:$0xff]
    %v41 = vld [vmem:[#allocation2 + $0x8] sm:$0xff]
    %v42 = vld [vmem:[#allocation5] sm:$0xff]
    %v43 = vld [vmem:[#allocation5 + $0x8] sm:$0xff]
    %v44 = vadd.f32 %v40, %v42
    %v45 = vadd.f32 %v41, %v43
    %46 = vst [vmem:[#allocation7] sm:$0xff] %v44
    %47 = vst [vmem:[#allocation7 + $0x8] sm:$0xff] %v45
    // Predicated region
    $region18: #{tpu_custom_call.1} parent=1 // pred_check
      _
    $region19: #{tpu_custom_call.1} parent=1 // pred_check_branch
      %49 = sbr.rel (0) target = $region21
    $region20: #{tpu_custom_call.1} parent=1 // pred_region
      %s51 = ssub.s32 256, 256
      %52 = vsyncadd [#allocation4], %s51
      %s53 = sshll.u32 [#allocation7], 4
      %s54 = int_to_ptr.vmem [resolvable:$true] %s53
      %59 = dma.vmem_to_hbm [thread:$0]  %s54, 256, %s2, [#allocation4], 128, 128, 8
    $region21: #{tpu_custom_call.1} parent=1 // pred_fallthru
      _
    // Predicated region
    $region22: #{tpu_custom_call.1} parent=1 // pred_check
      _
    $region23: #{tpu_custom_call.1} parent=1 // pred_check_branch
      %61 = sbr.rel (0) target = $region25
    $region24: #{tpu_custom_call.1} parent=1 // pred_region
      %62 = dma.done [#allocation4], 256
    $region25: #{tpu_custom_call.1} parent=1 // pred_fallthru
      _
    %63 = vsyncpa [#allocation3], 1
    %64 = vsyncpa [#allocation6], 1
    %65 = vsyncpa [#allocation4], 1

</llo_original>
